<compile_context>
chip_gen: v6e
topology: v6e:2x2x1
jax: 0.10.0
libtpu: 0.0.40
codegen_flags: <defaults>
</compile_context>

<pallas_src>
import jax
import jax.numpy as jnp
from jax import lax
from jax.experimental import pallas as pl
from jax.experimental.pallas import tpu as pltpu

_LANE = 128


def _round_up(x, m):
    return ((x + m - 1) // m) * m


def _q_mlp_kernel(obs_ref, act_ref, w1o_ref, w1a_ref, b1_ref,
                  w2_ref, b2_ref, w3_ref, b3_ref, out_ref):
    """One batch tile of the fused 3-layer MLP, feature-major activations.

    obs_ref: (TB, obs_dim)       act_ref: (TB, act_dim)
    w1o_ref: (H1, obs_dim)       w1a_ref: (H1, act_dim)     b1_ref: (H1, 1)
    w2_ref:  (H2, H1)            b2_ref:  (H2, 1)
    w3_ref:  (1, H2)             b3_ref:  (1,)  in SMEM
    out_ref: (1, TB)  -- q for this tile, batch along the lane axis.
    """
    w_dtype = w2_ref.dtype

    # Layer 1 (fused concat): h1ᵀ[h, t] = Σ_k W1[k, h] · x[t, k]
    #   = W1_obsᵀ·obsᵀ + W1_actᵀ·actᵀ, contracting each operand's dim 1.
    h1 = lax.dot_general(w1o_ref[...], obs_ref[...],
                         (((1,), (1,)), ((), ())),
                         preferred_element_type=jnp.float32)
    h1 = h1 + lax.dot_general(w1a_ref[...], act_ref[...],
                              (((1,), (1,)), ((), ())),
                              preferred_element_type=jnp.float32)
    h1 = jnp.maximum(h1 + b1_ref[...], 0.0)                       # (H1, TB) f32

    # Layer 2: canonical (H2, H1) @ (H1, TB) matmul.
    h2 = jnp.dot(w2_ref[...], h1.astype(w_dtype),
                 preferred_element_type=jnp.float32)
    h2 = jnp.maximum(h2 + b2_ref[...], 0.0)                       # (H2, TB) f32

    # Layer 3 (out_features = 1): (1, H2) @ (H2, TB) -> lane-dense (1, TB).
    q = jnp.dot(w3_ref[...], h2.astype(w_dtype),
                preferred_element_type=jnp.float32)
    out_ref[...] = q + b3_ref[0]                                  # scalar bias


def prepare_q_params(params, obs_dim, *, dtype=jnp.float32):
    """One-time weight prep (split / transpose / reshape), hoisted out of the
    per-call hot path.  `dtype` controls the matmul streaming dtype
    (jnp.bfloat16 is worthwhile on HBM-poor chips, e.g. v5e)."""
    w1, b1 = params["w1"], params["b1"]          # (obs+act, H1), (H1,)
    w2, b2 = params["w2"], params["b2"]          # (H1, H2),      (H2,)
    w3, b3 = params["w3"], params["b3"]          # (1, H2),       (1,)
    return {
        "w1_obs_t": jnp.asarray(w1[:obs_dim, :].T, dtype=dtype),   # (H1, obs_dim)
        "w1_act_t": jnp.asarray(w1[obs_dim:, :].T, dtype=dtype),   # (H1, act_dim)
        "b1": jnp.asarray(b1, jnp.float32).reshape(-1, 1),         # (H1, 1)
        "w2_t": jnp.asarray(w2.T, dtype=dtype),                    # (H2, H1)
        "b2": jnp.asarray(b2, jnp.float32).reshape(-1, 1),         # (H2, 1)
        "w3": jnp.asarray(w3, dtype=dtype).reshape(1, -1),         # (1, H2)
        "b3": jnp.asarray(b3, jnp.float32).reshape(-1),            # (1,)  -> SMEM
    }


def mlp_q_function(obs, act, qp, *, block_b=8192, num_parallel_tiles=2):
    """Pallas-backed forward of MLPQFunction.  Returns q of shape (B,) f32.

    `qp` is the output of `prepare_q_params`.  The grid targets
    `num_parallel_tiles` tiles (2 => both TensorCores on v7x; on v5e/v6e the
    extra step costs ~0.35 µs and is negligible), capped at `block_b` rows per
    tile to bound VMEM (still < ~1.5 MB at the default cap)."""
    dtype = qp["w2_t"].dtype
    obs = obs.astype(dtype)
    act = act.astype(dtype)
    B, obs_dim = obs.shape
    act_dim = act.shape[1]
    H1 = qp["w1_obs_t"].shape[0]
    H2 = qp["w2_t"].shape[0]

    # Tile size: multiple of 128 lanes (lane-dense output blocks), ~B/tiles.
    tiles = max(1, num_parallel_tiles)
    TB = _round_up(pl.cdiv(B, tiles), _LANE)
    TB = min(TB, _round_up(block_b, _LANE))
    TB = max(TB, _LANE)
    B_pad = _round_up(B, TB)
    if B_pad != B:
        obs = jnp.pad(obs, ((0, B_pad - B), (0, 0)))
        act = jnp.pad(act, ((0, B_pad - B), (0, 0)))
    grid = (B_pad // TB,)

    item = jnp.dtype(dtype).itemsize
    flops = 2 * B_pad * (obs_dim * H1 + act_dim * H1 + H1 * H2 + H2)
    bytes_accessed = (item * (B_pad * (obs_dim + act_dim)
                              + (obs_dim + act_dim) * H1 + H1 * H2 + H2)
                      + 4 * (B_pad + H1 + H2 + 1))

    q_rows = pl.pallas_call(
        _q_mlp_kernel,
        out_shape=jax.ShapeDtypeStruct((1, B_pad), jnp.float32),
        grid=grid,
        in_specs=[
            pl.BlockSpec((TB, obs_dim), lambda i: (i, 0)),     # obs tile
            pl.BlockSpec((TB, act_dim), lambda i: (i, 0)),     # act tile
            pl.BlockSpec((H1, obs_dim), lambda i: (0, 0)),     # W1[:o]ᵀ   (resident)
            pl.BlockSpec((H1, act_dim), lambda i: (0, 0)),     # W1[o:]ᵀ   (resident)
            pl.BlockSpec((H1, 1),       lambda i: (0, 0)),     # b1        (resident)
            pl.BlockSpec((H2, H1),      lambda i: (0, 0)),     # W2ᵀ       (resident)
            pl.BlockSpec((H2, 1),       lambda i: (0, 0)),     # b2        (resident)
            pl.BlockSpec((1, H2),       lambda i: (0, 0)),     # w3        (resident)
            pl.BlockSpec(memory_space=pltpu.MemorySpace.SMEM), # b3 scalar (SMEM)
        ],
        out_specs=pl.BlockSpec((1, TB), lambda i: (0, i)),     # lane-dense rows
        compiler_params=pltpu.CompilerParams(
            dimension_semantics=("parallel",)),                 # megacore on v7x
        cost_estimate=pl.CostEstimate(
            flops=flops, transcendentals=0, bytes_accessed=bytes_accessed),
    )(obs, act, qp["w1_obs_t"], qp["w1_act_t"], qp["b1"],
      qp["w2_t"], qp["b2"], qp["w3"], qp["b3"])

    q = q_rows[0]
    return q[:B] if B_pad != B else q


def init_params(key, obs_dim, act_dim, hidden_sizes):
    """Deterministic synthetic init (shapes match the PyTorch module).
    Stored in the 'natural' x @ W layout; `prepare_q_params` converts once.
    Note: scaled-normal init, not PyTorch's Kaiming-uniform (shapes match;
    exact init distribution is irrelevant to the forward kernel)."""
    h1, h2 = hidden_sizes
    in_dim = obs_dim + act_dim
    ks = jax.random.split(key, 6)

    def w(k, shape, fan_in):
        scale = 1.0 / jnp.sqrt(jnp.float32(fan_in))
        return scale * jax.random.normal(k, shape, dtype=jnp.float32)

    return {
        "w1": w(ks[0], (in_dim, h1), in_dim),
        "b1": w(ks[1], (h1,), in_dim),
        "w2": w(ks[2], (h1, h2), h1),
        "b2": w(ks[3], (h2,), h1),
        "w3": w(ks[4], (1, h2), h2),     # (out=1, in=h2), PyTorch layout
        "b3": w(ks[5], (1,), h2),
    }


def reference_forward(obs, act, params):
    """Pure-JAX reference for correctness check."""
    x = jnp.concatenate([obs, act], axis=-1)
    h1 = jnp.maximum(x @ params["w1"] + params["b1"], 0.0)
    h2 = jnp.maximum(h1 @ params["w2"] + params["b2"], 0.0)
    q = h2 @ params["w3"].T + params["b3"]
    return jnp.squeeze(q, -1)


if __name__ == "__main__":
    # Shapes consistent with the module: obs_dim=12, act_dim=4,
    # hidden_sizes=(32, 32), activation=ReLU.  B=256 -> TB=128, grid=2
    # ("parallel" two-tile path exercised).
    B, OBS_DIM, ACT_DIM = 256, 12, 4
    HIDDEN = (32, 32)

    key = jax.random.PRNGKey(0)
    k_obs, k_act, k_param = jax.random.split(key, 3)

    obs = jax.random.normal(k_obs, (B, OBS_DIM), dtype=jnp.float32)
    act = jax.random.normal(k_act, (B, ACT_DIM), dtype=jnp.float32)
    params = init_params(k_param, OBS_DIM, ACT_DIM, HIDDEN)
    qp = prepare_q_params(params, OBS_DIM)          # one-time weight prep

    q = mlp_q_function(obs, act, qp)
    jax.block_until_ready(q)

    q_ref = reference_forward(obs, act, params)
    assert q.shape == (B,), f"bad output shape {q.shape}"
    assert jnp.allclose(q, q_ref, atol=1e-4, rtol=1e-4), "mismatch vs reference"

    # Also exercise the padding / single-tile path (batch not a tile multiple).
    q_small = mlp_q_function(obs[:13], act[:13], qp)
    jax.block_until_ready(q_small)
    assert q_small.shape == (13,)
    assert jnp.allclose(q_small, q_ref[:13], atol=1e-4, rtol=1e-4), "mismatch (padded path)"

    print("KERNEL_OK")
</pallas_src>

<mosaic_0001>
module attributes {stable_mosaic.version = 11 : i64} {
  func.func @_q_mlp_kernel(%arg0: i32, %arg1: memref<128x12xf32, #tpu.memory_space<vmem>>, %arg2: memref<128x4xf32, #tpu.memory_space<vmem>>, %arg3: memref<32x12xf32, #tpu.memory_space<vmem>>, %arg4: memref<32x4xf32, #tpu.memory_space<vmem>>, %arg5: memref<32x1xf32, #tpu.memory_space<vmem>>, %arg6: memref<32x32xf32, #tpu.memory_space<vmem>>, %arg7: memref<32x1xf32, #tpu.memory_space<vmem>>, %arg8: memref<1x32xf32, #tpu.memory_space<vmem>>, %arg9: memref<1xf32, #tpu.memory_space<smem>>, %arg10: memref<1x128xf32, #tpu.memory_space<vmem>>) attributes {dimension_semantics = [#tpu.dimension_semantics<parallel>], iteration_bounds = array<i64: 2>, scalar_prefetch = 0 : i64, scratch_operands = 0 : i64, tpu.core_type = #tpu.core_type<tc>, window_params = [{transform_indices = @transform_0, window_bounds = array<i64: 128, 12>}, {transform_indices = @transform_1, window_bounds = array<i64: 128, 4>}, {pipeline_mode = #tpu.pipeline_mode<synchronous>, transform_indices = @transform_2, window_bounds = array<i64: 32, 12>}, {pipeline_mode = #tpu.pipeline_mode<synchronous>, transform_indices = @transform_3, window_bounds = array<i64: 32, 4>}, {pipeline_mode = #tpu.pipeline_mode<synchronous>, transform_indices = @transform_4, window_bounds = array<i64: 32, 1>}, {pipeline_mode = #tpu.pipeline_mode<synchronous>, transform_indices = @transform_5, window_bounds = array<i64: 32, 32>}, {pipeline_mode = #tpu.pipeline_mode<synchronous>, transform_indices = @transform_6, window_bounds = array<i64: 32, 1>}, {pipeline_mode = #tpu.pipeline_mode<synchronous>, transform_indices = @transform_7, window_bounds = array<i64: 1, 32>}, {transform_indices = @transform_8, window_bounds = array<i64: 1>}, {transform_indices = @transform_9, window_bounds = array<i64: 1, 128>}]} {
    %c0 = arith.constant 0 : index
    %c0_0 = arith.constant 0 : index
    %0 = vector.load %arg3[%c0, %c0_0] : memref<32x12xf32, #tpu.memory_space<vmem>>, vector<32x12xf32>
    %c0_1 = arith.constant 0 : index
    %c0_2 = arith.constant 0 : index
    %1 = vector.load %arg1[%c0_1, %c0_2] : memref<128x12xf32, #tpu.memory_space<vmem>>, vector<128x12xf32>
    %cst = arith.constant dense<0.000000e+00> : vector<32x128xf32>
    %2 = tpu.matmul %0, %1, %cst {dimension_numbers = #tpu.dot_dimension_numbers<[1], [1], [0], [0], [0, 0, 1, 0], [], []>} : vector<32x12xf32>, vector<128x12xf32>, vector<32x128xf32> -> vector<32x128xf32>
    %c0_3 = arith.constant 0 : index
    %c0_4 = arith.constant 0 : index
    %3 = vector.load %arg4[%c0_3, %c0_4] : memref<32x4xf32, #tpu.memory_space<vmem>>, vector<32x4xf32>
    %c0_5 = arith.constant 0 : index
    %c0_6 = arith.constant 0 : index
    %4 = vector.load %arg2[%c0_5, %c0_6] : memref<128x4xf32, #tpu.memory_space<vmem>>, vector<128x4xf32>
    %cst_7 = arith.constant dense<0.000000e+00> : vector<32x128xf32>
    %5 = tpu.matmul %3, %4, %cst_7 {dimension_numbers = #tpu.dot_dimension_numbers<[1], [1], [0], [0], [0, 0, 1, 0], [], []>} : vector<32x4xf32>, vector<128x4xf32>, vector<32x128xf32> -> vector<32x128xf32>
    %6 = arith.addf %2, %5 : vector<32x128xf32>
    %c0_8 = arith.constant 0 : index
    %c0_9 = arith.constant 0 : index
    %7 = vector.load %arg5[%c0_8, %c0_9] : memref<32x1xf32, #tpu.memory_space<vmem>>, vector<32x1xf32>
    %8 = vector.broadcast %7 : vector<32x1xf32> to vector<32x128xf32>
    %9 = arith.addf %6, %8 : vector<32x128xf32>
    %cst_10 = arith.constant 0.000000e+00 : f32
    %10 = vector.broadcast %cst_10 : f32 to vector<32x128xf32>
    %11 = arith.maximumf %9, %10 : vector<32x128xf32>
    %c0_11 = arith.constant 0 : index
    %c0_12 = arith.constant 0 : index
    %12 = vector.load %arg6[%c0_11, %c0_12] : memref<32x32xf32, #tpu.memory_space<vmem>>, vector<32x32xf32>
    %cst_13 = arith.constant dense<0.000000e+00> : vector<32x128xf32>
    %13 = tpu.matmul %12, %11, %cst_13 {dimension_numbers = #tpu.dot_dimension_numbers<[1], [0], [0], [1], [0, 0, 1, 1], [], []>} : vector<32x32xf32>, vector<32x128xf32>, vector<32x128xf32> -> vector<32x128xf32>
    %c0_14 = arith.constant 0 : index
    %c0_15 = arith.constant 0 : index
    %14 = vector.load %arg7[%c0_14, %c0_15] : memref<32x1xf32, #tpu.memory_space<vmem>>, vector<32x1xf32>
    %15 = vector.broadcast %14 : vector<32x1xf32> to vector<32x128xf32>
    %16 = arith.addf %13, %15 : vector<32x128xf32>
    %cst_16 = arith.constant 0.000000e+00 : f32
    %17 = vector.broadcast %cst_16 : f32 to vector<32x128xf32>
    %18 = arith.maximumf %16, %17 : vector<32x128xf32>
    %c0_17 = arith.constant 0 : index
    %c0_18 = arith.constant 0 : index
    %19 = vector.load %arg8[%c0_17, %c0_18] : memref<1x32xf32, #tpu.memory_space<vmem>>, vector<1x32xf32>
    %cst_19 = arith.constant dense<0.000000e+00> : vector<1x128xf32>
    %20 = tpu.matmul %19, %18, %cst_19 {dimension_numbers = #tpu.dot_dimension_numbers<[1], [0], [0], [1], [0, 0, 1, 1], [], []>} : vector<1x32xf32>, vector<32x128xf32>, vector<1x128xf32> -> vector<1x128xf32>
    %c0_20 = arith.constant 0 : index
    %21 = memref.load %arg9[%c0_20] : memref<1xf32, #tpu.memory_space<smem>>
    %22 = vector.broadcast %21 : f32 to vector<1x128xf32>
    %23 = arith.addf %20, %22 : vector<1x128xf32>
    %c0_21 = arith.constant 0 : index
    %c0_22 = arith.constant 0 : index
    %24 = vector.load %arg10[%c0_21, %c0_22] : memref<1x128xf32, #tpu.memory_space<vmem>>, vector<1x128xf32>
    tpu.vector_store %arg10[%c0_21, %c0_22], %23 {strides = array<i32>} : memref<1x128xf32, #tpu.memory_space<vmem>>, vector<1x128xf32>,
    return
  }
  func.func @transform_0(%arg0: i32) -> (i32, i32) {
    %c0_i32 = arith.constant 0 : i32
    %c0_i32_0 = arith.constant 0 : i32
    return %arg0, %c0_i32 : i32, i32
  }
  func.func @transform_1(%arg0: i32) -> (i32, i32) {
    %c0_i32 = arith.constant 0 : i32
    %c0_i32_0 = arith.constant 0 : i32
    return %arg0, %c0_i32 : i32, i32
  }
  func.func @transform_2(%arg0: i32) -> (i32, i32) {
    %c0_i32 = arith.constant 0 : i32
    %c0_i32_0 = arith.constant 0 : i32
    %c0_i32_1 = arith.constant 0 : i32
    return %c0_i32, %c0_i32_0 : i32, i32
  }
  func.func @transform_3(%arg0: i32) -> (i32, i32) {
    %c0_i32 = arith.constant 0 : i32
    %c0_i32_0 = arith.constant 0 : i32
    %c0_i32_1 = arith.constant 0 : i32
    return %c0_i32, %c0_i32_0 : i32, i32
  }
  func.func @transform_4(%arg0: i32) -> (i32, i32) {
    %c0_i32 = arith.constant 0 : i32
    %c0_i32_0 = arith.constant 0 : i32
    %c0_i32_1 = arith.constant 0 : i32
    return %c0_i32, %c0_i32_0 : i32, i32
  }
  func.func @transform_5(%arg0: i32) -> (i32, i32) {
    %c0_i32 = arith.constant 0 : i32
    %c0_i32_0 = arith.constant 0 : i32
    %c0_i32_1 = arith.constant 0 : i32
    return %c0_i32, %c0_i32_0 : i32, i32
  }
  func.func @transform_6(%arg0: i32) -> (i32, i32) {
    %c0_i32 = arith.constant 0 : i32
    %c0_i32_0 = arith.constant 0 : i32
    %c0_i32_1 = arith.constant 0 : i32
    return %c0_i32, %c0_i32_0 : i32, i32
  }
  func.func @transform_7(%arg0: i32) -> (i32, i32) {
    %c0_i32 = arith.constant 0 : i32
    %c0_i32_0 = arith.constant 0 : i32
    %c0_i32_1 = arith.constant 0 : i32
    return %c0_i32, %c0_i32_0 : i32, i32
  }
  func.func @transform_8(%arg0: i32) -> i32 {
    %c0_i32 = arith.constant 0 : i32
    %c0_i32_0 = arith.constant 0 : i32
    return %c0_i32 : i32
  }
  func.func @transform_9(%arg0: i32) -> (i32, i32) {
    %c0_i32 = arith.constant 0 : i32
    %c0_i32_0 = arith.constant 0 : i32
    return %c0_i32, %arg0 : i32, i32
  }
}

</mosaic_0001>

<llo_original>
// kernel: tpu_custom_call.1
$region0: #{tpu_custom_call.1}
  #allocation0 [shape = 'u32[]', space=smem, size = 0x4, offset = 0x4, fixed_abs, tag = 'smem constant byte address 0x4 - core index']
  #allocation1 [shape = 'u32[144,128]{1,0:T(1,128)}', space=vmem, size = 0x12000, scoped, tag = 'internal scratch']
  #allocation2 [shape = 'f32[1]{0:T(128)S(6)}', space=smem, size = 0x200, scoped, tag = 'scoped memory for tpu_custom_call.1']
  %s0 = inlined_call_operand.vmem [shape: f32[256,12], index: 0, kind: input, shape index: {}]
  %s1 = inlined_call_operand.vmem [shape: f32[256,4], index: 1, kind: input, shape index: {}]
  %s2 = inlined_call_operand.vmem [shape: f32[32,12], index: 2, kind: input, shape index: {}]
  %s3 = inlined_call_operand.vmem [shape: f32[32,4], index: 3, kind: input, shape index: {}]
  %s4 = inlined_call_operand.vmem [shape: f32[32,1], index: 4, kind: input, shape index: {}]
  %s5 = inlined_call_operand.vmem [shape: f32[32,32], index: 5, kind: input, shape index: {}]
  %s6 = inlined_call_operand.vmem [shape: f32[32,1], index: 6, kind: input, shape index: {}]
  %s7 = inlined_call_operand.vmem [shape: f32[1,32], index: 7, kind: input, shape index: {}]
  %s8 = inlined_call_operand.<no memory space> [shape: f32[1], index: 8, kind: input, shape index: {}]
  %s9 = inlined_call_operand.hbm [shape: f32[1,256], index: 9, kind: output, shape index: {}]
  %s10 = sld [smem:[#allocation0]]
  $region69: #{tpu_custom_call.1} parent=0
    _
  %s12 = ssub.s32 1, %s10
  %s13 = scalar_select 0, %s12, %s10
  %14 = sst [smem:[#allocation2]] %s8
  $region1: #{tpu_custom_call.1} parent=0
    #allocation3 [shape = 'u8[1024]{0}', space=vmem, size = 0x400, scoped, tag = 'output window, operand 0']
    #allocation4 [shape = 's32[2]{0}', space=sflag, size = 0x8, scoped, tag = 'scoped memory for tpu_custom_call.1']
    %15 = vsyncpa [#allocation4], 0
    %s16 = scalar_lea.sflag [#allocation4], 1
    %17 = vsyncpa %s16, 0
    loop: start=0, step=1, limit=4
    $region2: #{tpu_custom_call.1} parent=1 // loop_pre_header
      _
    $region3: #{tpu_custom_call.1} parent=1 // loop_header
      %s19 = sphi 0, %s23
      %p20 = scmp.ge.s32.totalorder %s19, 4
      %s29 = sphi 0, %s31
      %s32 = sphi 0, %s29
      %s33 = sphi 0, %s32
      %s49 = sphi 0, %s33
      %s55 = sphi 0, %s57
      %s58 = sphi 0, %s55
      %s59 = sphi 0, %s58
      %s75 = sphi 0, %s59
      %s79 = sphi 0, %s79
      %s81 = sphi 0, %s79
      %s82 = sphi 0, %s81
      %s96 = sphi 0, %s82
      %s100 = sphi 0, %s100
      %s102 = sphi 0, %s100
      %s103 = sphi 0, %s102
      %s117 = sphi 0, %s103
      %s121 = sphi 0, %s121
      %s123 = sphi 0, %s121
      %s124 = sphi 0, %s123
      %s138 = sphi 0, %s124
      %s142 = sphi 0, %s142
      %s144 = sphi 0, %s142
      %s145 = sphi 0, %s144
      %s159 = sphi 0, %s145
      %s163 = sphi 0, %s163
      %s165 = sphi 0, %s163
      %s166 = sphi 0, %s165
      %s180 = sphi 0, %s166
      %s184 = sphi 0, %s184
      %s186 = sphi 0, %s184
      %s187 = sphi 0, %s186
      %s201 = sphi 0, %s187
      %s205 = sphi 0, %s205
      %s207 = sphi 0, %s205
      %s208 = sphi 0, %s207
      %s222 = sphi 0, %s208
      %s228 = sphi 0, %s230
      %s231 = sphi 0, %s228
      %s232 = sphi 0, %s231
      %s248 = sphi 0, %s232
    $region4: #{tpu_custom_call.1} parent=1 // loop_header_branch
      %22 = sbr.rel (%p20) target = $region8
    $region5: #{tpu_custom_call.1} parent=1 // loop_body
      %s24 = ssub.s32 %s19, 1
      %s25 = ssub.s32 %s19, 2
      %s26 = sadd.s32 %s19, 1
      %s27 = ssub.s32 %s19, %s26
      %p28 = scmp.eq.s32.totalorder %s27, 0
      %s30 = sadd.s32 %s29, 1
      %s31 = scalar_select %p28, %s29, %s30
      %p34 = pneg %p28
      %p35 = scmp.eq.s32.totalorder %s19, 1
      %p36 = por %p34, %p35
      %p37 = scmp.ne.s32.totalorder %s29, %s32
      %p38 = scmp.eq.s32.totalorder %s19, 0
      %p39 = por %p37, %p38
      %p40 = scmp.ne.s32.totalorder %s29, %s32
      %p41 = scmp.eq.s32.totalorder %s24, 1
      %p42 = por %p40, %p41
      %p43 = scmp.ne.s32.totalorder %s32, %s33
      %p44 = scmp.eq.s32.totalorder %s24, 0
      %p45 = por %p43, %p44
      %p46 = scmp.ne.s32.totalorder %s32, %s33
      %p47 = scmp.eq.s32.totalorder %s25, 1
      %p48 = por %p46, %p47
      %p50 = scmp.ne.s32.totalorder %s33, %s49
      %p51 = scmp.eq.s32.totalorder %s25, 0
      %p52 = por %p50, %p51
      %s53 = ssub.s32 %s19, %s26
      %p54 = scmp.eq.s32.totalorder %s53, 0
      %s56 = sadd.s32 %s55, 1
      %s57 = scalar_select %p54, %s55, %s56
      %p60 = pneg %p54
      %p61 = scmp.eq.s32.totalorder %s19, 1
      %p62 = por %p60, %p61
      %p63 = scmp.ne.s32.totalorder %s55, %s58
      %p64 = scmp.eq.s32.totalorder %s19, 0
      %p65 = por %p63, %p64
      %p66 = scmp.ne.s32.totalorder %s55, %s58
      %p67 = scmp.eq.s32.totalorder %s24, 1
      %p68 = por %p66, %p67
      %p69 = scmp.ne.s32.totalorder %s58, %s59
      %p70 = scmp.eq.s32.totalorder %s24, 0
      %p71 = por %p69, %p70
      %p72 = scmp.ne.s32.totalorder %s58, %s59
      %p73 = scmp.eq.s32.totalorder %s25, 1
      %p74 = por %p72, %p73
      %p76 = scmp.ne.s32.totalorder %s59, %s75
      %p77 = scmp.eq.s32.totalorder %s25, 0
      %p78 = por %p76, %p77
      %s80 = sadd.s32 %s79, 1
      %p83 = scmp.eq.s32.totalorder %s19, 1
      %p84 = scmp.ne.s32.totalorder %s79, %s81
      %p85 = scmp.eq.s32.totalorder %s19, 0
      %p86 = por %p84, %p85
      %p87 = scmp.ne.s32.totalorder %s79, %s81
      %p88 = scmp.eq.s32.totalorder %s24, 1
      %p89 = por %p87, %p88
      %p90 = scmp.ne.s32.totalorder %s81, %s82
      %p91 = scmp.eq.s32.totalorder %s24, 0
      %p92 = por %p90, %p91
      %p93 = scmp.ne.s32.totalorder %s81, %s82
      %p94 = scmp.eq.s32.totalorder %s25, 1
      %p95 = por %p93, %p94
      %p97 = scmp.ne.s32.totalorder %s82, %s96
      %p98 = scmp.eq.s32.totalorder %s25, 0
      %p99 = por %p97, %p98
      %s101 = sadd.s32 %s100, 1
      %p104 = scmp.eq.s32.totalorder %s19, 1
      %p105 = scmp.ne.s32.totalorder %s100, %s102
      %p106 = scmp.eq.s32.totalorder %s19, 0
      %p107 = por %p105, %p106
      %p108 = scmp.ne.s32.totalorder %s100, %s102
      %p109 = scmp.eq.s32.totalorder %s24, 1
      %p110 = por %p108, %p109
      %p111 = scmp.ne.s32.totalorder %s102, %s103
      %p112 = scmp.eq.s32.totalorder %s24, 0
      %p113 = por %p111, %p112
      %p114 = scmp.ne.s32.totalorder %s102, %s103
      %p115 = scmp.eq.s32.totalorder %s25, 1
      %p116 = por %p114, %p115
      %p118 = scmp.ne.s32.totalorder %s103, %s117
      %p119 = scmp.eq.s32.totalorder %s25, 0
      %p120 = por %p118, %p119
      %s122 = sadd.s32 %s121, 1
      %p125 = scmp.eq.s32.totalorder %s19, 1
      %p126 = scmp.ne.s32.totalorder %s121, %s123
      %p127 = scmp.eq.s32.totalorder %s19, 0
      %p128 = por %p126, %p127
      %p129 = scmp.ne.s32.totalorder %s121, %s123
      %p130 = scmp.eq.s32.totalorder %s24, 1
      %p131 = por %p129, %p130
      %p132 = scmp.ne.s32.totalorder %s123, %s124
      %p133 = scmp.eq.s32.totalorder %s24, 0
      %p134 = por %p132, %p133
      %p135 = scmp.ne.s32.totalorder %s123, %s124
      %p136 = scmp.eq.s32.totalorder %s25, 1
      %p137 = por %p135, %p136
      %p139 = scmp.ne.s32.totalorder %s124, %s138
      %p140 = scmp.eq.s32.totalorder %s25, 0
      %p141 = por %p139, %p140
      %s143 = sadd.s32 %s142, 1
      %p146 = scmp.eq.s32.totalorder %s19, 1
      %p147 = scmp.ne.s32.totalorder %s142, %s144
      %p148 = scmp.eq.s32.totalorder %s19, 0
      %p149 = por %p147, %p148
      %p150 = scmp.ne.s32.totalorder %s142, %s144
      %p151 = scmp.eq.s32.totalorder %s24, 1
      %p152 = por %p150, %p151
      %p153 = scmp.ne.s32.totalorder %s144, %s145
      %p154 = scmp.eq.s32.totalorder %s24, 0
      %p155 = por %p153, %p154
      %p156 = scmp.ne.s32.totalorder %s144, %s145
      %p157 = scmp.eq.s32.totalorder %s25, 1
      %p158 = por %p156, %p157
      %p160 = scmp.ne.s32.totalorder %s145, %s159
      %p161 = scmp.eq.s32.totalorder %s25, 0
      %p162 = por %p160, %p161
      %s164 = sadd.s32 %s163, 1
      %p167 = scmp.eq.s32.totalorder %s19, 1
      %p168 = scmp.ne.s32.totalorder %s163, %s165
      %p169 = scmp.eq.s32.totalorder %s19, 0
      %p170 = por %p168, %p169
      %p171 = scmp.ne.s32.totalorder %s163, %s165
      %p172 = scmp.eq.s32.totalorder %s24, 1
      %p173 = por %p171, %p172
      %p174 = scmp.ne.s32.totalorder %s165, %s166
      %p175 = scmp.eq.s32.totalorder %s24, 0
      %p176 = por %p174, %p175
      %p177 = scmp.ne.s32.totalorder %s165, %s166
      %p178 = scmp.eq.s32.totalorder %s25, 1
      %p179 = por %p177, %p178
      %p181 = scmp.ne.s32.totalorder %s166, %s180
      %p182 = scmp.eq.s32.totalorder %s25, 0
      %p183 = por %p181, %p182
      %s185 = sadd.s32 %s184, 1
      %p188 = scmp.eq.s32.totalorder %s19, 1
      %p189 = scmp.ne.s32.totalorder %s184, %s186
      %p190 = scmp.eq.s32.totalorder %s19, 0
      %p191 = por %p189, %p190
      %p192 = scmp.ne.s32.totalorder %s184, %s186
      %p193 = scmp.eq.s32.totalorder %s24, 1
      %p194 = por %p192, %p193
      %p195 = scmp.ne.s32.totalorder %s186, %s187
      %p196 = scmp.eq.s32.totalorder %s24, 0
      %p197 = por %p195, %p196
      %p198 = scmp.ne.s32.totalorder %s186, %s187
      %p199 = scmp.eq.s32.totalorder %s25, 1
      %p200 = por %p198, %p199
      %p202 = scmp.ne.s32.totalorder %s187, %s201
      %p203 = scmp.eq.s32.totalorder %s25, 0
      %p204 = por %p202, %p203
      %s206 = sadd.s32 %s205, 1
      %p209 = scmp.eq.s32.totalorder %s19, 1
      %p210 = scmp.ne.s32.totalorder %s205, %s207
      %p211 = scmp.eq.s32.totalorder %s19, 0
      %p212 = por %p210, %p211
      %p213 = scmp.ne.s32.totalorder %s205, %s207
      %p214 = scmp.eq.s32.totalorder %s24, 1
      %p215 = por %p213, %p214
      %p216 = scmp.ne.s32.totalorder %s207, %s208
      %p217 = scmp.eq.s32.totalorder %s24, 0
      %p218 = por %p216, %p217
      %p219 = scmp.ne.s32.totalorder %s207, %s208
      %p220 = scmp.eq.s32.totalorder %s25, 1
      %p221 = por %p219, %p220
      %p223 = scmp.ne.s32.totalorder %s208, %s222
      %p224 = scmp.eq.s32.totalorder %s25, 0
      %p225 = por %p223, %p224
      %s226 = ssub.s32 %s19, %s26
      %p227 = scmp.eq.s32.totalorder %s226, 0
      %s229 = sadd.s32 %s228, 1
      %s230 = scalar_select %p227, %s228, %s229
      %p233 = pneg %p227
      %p234 = scmp.eq.s32.totalorder %s19, 1
      %p235 = por %p233, %p234
      %p236 = scmp.ne.s32.totalorder %s228, %s231
      %p237 = scmp.eq.s32.totalorder %s19, 0
      %p238 = por %p236, %p237
      %p239 = scmp.ne.s32.totalorder %s228, %s231
      %p240 = scmp.eq.s32.totalorder %s24, 1
      %p241 = por %p239, %p240
      %p242 = scmp.ne.s32.totalorder %s231, %s232
      %p243 = scmp.eq.s32.totalorder %s24, 0
      %p244 = por %p242, %p243
      %p245 = scmp.ne.s32.totalorder %s231, %s232
      %p246 = scmp.eq.s32.totalorder %s25, 1
      %p247 = por %p245, %p246
      %p249 = scmp.ne.s32.totalorder %s232, %s248
      %p250 = scmp.eq.s32.totalorder %s25, 0
      %p251 = por %p249, %p250
      %p252 = scmp.le.s32.totalorder 1, %s19
      %p253 = scmp.lt.s32.totalorder %s19, 3
      %p254 = pnand %p252, %p253
      %p255 = pneg %p254
      // Predicated region
      $region9: #{tpu_custom_call.1} parent=5 // pred_check
        _
      $region10: #{tpu_custom_call.1} parent=5 // pred_check_branch
        %257 = sbr.rel (%p254) target = $region12
      $region11: #{tpu_custom_call.1} parent=5 // pred_region
        %s258 = ssub.s32 %s19, 1
        // Predicated region
        $region13: #{tpu_custom_call.1} parent=11 // pred_check
          %p259 = pneg %p92
        $region14: #{tpu_custom_call.1} parent=11 // pred_check_branch
          %261 = sbr.rel (%p259) target = $region16
        $region15: #{tpu_custom_call.1} parent=11 // pred_region
          _
        $region16: #{tpu_custom_call.1} parent=11 // pred_fallthru
          _
        // Predicated region
        $region17: #{tpu_custom_call.1} parent=11 // pred_check
          %p262 = pneg %p113
        $region18: #{tpu_custom_call.1} parent=11 // pred_check_branch
          %264 = sbr.rel (%p262) target = $region20
        $region19: #{tpu_custom_call.1} parent=11 // pred_region
          _
        $region20: #{tpu_custom_call.1} parent=11 // pred_fallthru
          _
        // Predicated region
        $region21: #{tpu_custom_call.1} parent=11 // pred_check
          %p265 = pneg %p134
        $region22: #{tpu_custom_call.1} parent=11 // pred_check_branch
          %267 = sbr.rel (%p265) target = $region24
        $region23: #{tpu_custom_call.1} parent=11 // pred_region
          _
        $region24: #{tpu_custom_call.1} parent=11 // pred_fallthru
          _
        // Predicated region
        $region25: #{tpu_custom_call.1} parent=11 // pred_check
          %p268 = pneg %p155
        $region26: #{tpu_custom_call.1} parent=11 // pred_check_branch
          %270 = sbr.rel (%p268) target = $region28
        $region27: #{tpu_custom_call.1} parent=11 // pred_region
          _
        $region28: #{tpu_custom_call.1} parent=11 // pred_fallthru
          _
        // Predicated region
        $region29: #{tpu_custom_call.1} parent=11 // pred_check
          %p271 = pneg %p176
        $region30: #{tpu_custom_call.1} parent=11 // pred_check_branch
          %273 = sbr.rel (%p271) target = $region32
        $region31: #{tpu_custom_call.1} parent=11 // pred_region
          _
        $region32: #{tpu_custom_call.1} parent=11 // pred_fallthru
          _
        // Predicated region
        $region33: #{tpu_custom_call.1} parent=11 // pred_check
          %p274 = pneg %p197
        $region34: #{tpu_custom_call.1} parent=11 // pred_check_branch
          %276 = sbr.rel (%p274) target = $region36
        $region35: #{tpu_custom_call.1} parent=11 // pred_region
          _
        $region36: #{tpu_custom_call.1} parent=11 // pred_fallthru
          _
        // Predicated region
        $region37: #{tpu_custom_call.1} parent=11 // pred_check
          %p277 = pneg %p218
        $region38: #{tpu_custom_call.1} parent=11 // pred_check_branch
          %279 = sbr.rel (%p277) target = $region40
        $region39: #{tpu_custom_call.1} parent=11 // pred_region
          _
        $region40: #{tpu_custom_call.1} parent=11 // pred_fallthru
          _
      $region12: #{tpu_custom_call.1} parent=5 // pred_fallthru
        _
      %p280 = scmp.lt.s32.totalorder %s19, 2
      // Predicated region
      $region41: #{tpu_custom_call.1} parent=5 // pred_check
        %p281 = pneg %p280
      $region42: #{tpu_custom_call.1} parent=5 // pred_check_branch
        %283 = sbr.rel (%p281) target = $region44
      $region43: #{tpu_custom_call.1} parent=5 // pred_region
        // Predicated region
        $region45: #{tpu_custom_call.1} parent=43 // pred_check
          %p284 = pneg %p39
        $region46: #{tpu_custom_call.1} parent=43 // pred_check_branch
          %286 = sbr.rel (%p284) target = $region48
        $region47: #{tpu_custom_call.1} parent=43 // pred_region
          %s287 = smul.u32 16, %s19
          %p288 = scmp.lt.s32.totalorder %s287, 31
          %s289 = scalar_select %p288, %s287, 31
          %s290 = smul.addr %s289, 8
          %s291 = scalar_lea.vmem %s0, %s290
          %s292 = smul.u32 16, %s19
        $region48: #{tpu_custom_call.1} parent=43 // pred_fallthru
          _
        // Predicated region
        $region49: #{tpu_custom_call.1} parent=43 // pred_check
          %p293 = pneg %p65
        $region50: #{tpu_custom_call.1} parent=43 // pred_check_branch
          %295 = sbr.rel (%p293) target = $region52
        $region51: #{tpu_custom_call.1} parent=43 // pred_region
          %s296 = smul.u32 16, %s19
          %p297 = scmp.lt.s32.totalorder %s296, 31
          %s298 = scalar_select %p297, %s296, 31
          %s299 = smul.addr %s298, 8
          %s300 = scalar_lea.vmem %s1, %s299
          %s301 = smul.u32 16, %s19
        $region52: #{tpu_custom_call.1} parent=43 // pred_fallthru
          _
      $region44: #{tpu_custom_call.1} parent=5 // pred_fallthru
        _
      %p302 = scmp.le.s32.totalorder 1, %s19
      %p303 = scmp.lt.s32.totalorder %s19, 3
      %p304 = pnand %p302, %p303
      %p305 = pneg %p304
      // Predicated region
      $region53: #{tpu_custom_call.1} parent=5 // pred_check
        _
      $region54: #{tpu_custom_call.1} parent=5 // pred_check_branch
        %307 = sbr.rel (%p304) target = $region56
      $region55: #{tpu_custom_call.1} parent=5 // pred_region
        %s308 = ssub.s32 %s19, 1
        %s309 = smul.u32 16, %s24
        %p310 = scmp.lt.s32.totalorder %s309, 31
        %s311 = scalar_select %p310, %s309, 31
        %s312 = smul.addr %s311, 8
        %s313 = scalar_lea.vmem %s0, %s312
        %p314 = pneg %p45
        %p315 = pneg %p42
        %s316 = smul.u32 16, %s24
        %p317 = scmp.lt.s32.totalorder %s316, 31
        %s318 = scalar_select %p317, %s316, 31
        %s319 = smul.addr %s318, 8
        %s320 = scalar_lea.vmem %s1, %s319
        %p321 = pneg %p71
        %p322 = pneg %p68
        %p323 = pneg %p92
        %p324 = pneg %p89
        %p325 = pneg %p113
        %p326 = pneg %p110
        %p327 = pneg %p134
        %p328 = pneg %p131
        %p329 = pneg %p155
        %p330 = pneg %p152
        %p331 = pneg %p176
        %p332 = pneg %p173
        %p333 = pneg %p197
        %p334 = pneg %p194
        %p335 = pneg %p218
        %p336 = pneg %p215
        %p337 = pneg %p244
        %p338 = pneg %p241
        %s339 = sand.u32 %s231, 1
        %s340 = scalar_lea.sflag [#allocation4], %s339
        %s341 = sand.u32 %s231, 1
        %s342 = scalar_lea.vmem [#allocation3], %s341
        %s343 = smul.u32 16, %s24
        %p344 = scmp.lt.s32.totalorder %s343, 31
        %s345 = scalar_select %p344, %s343, 31
        %s346 = smul.addr %s345, 8
        %s347 = scalar_lea.vmem %s0, %s346
        %s348 = smul.u32 16, %s24
        %s349 = smul.u32 16, %s24
        %p350 = scmp.lt.s32.totalorder %s349, 31
        %s351 = scalar_select %p350, %s349, 31
        %s352 = smul.addr %s351, 8
        %s353 = scalar_lea.vmem %s1, %s352
        %s354 = smul.u32 16, %s24
        %v355 = vld [vmem:[%s2] sm:$0xff]
        %v356 = vld [vmem:[%s2 + $0x8] sm:$0xff]
        %v357 = vld [vmem:[%s2 + $0x10] sm:$0xff]
        %v358 = vld [vmem:[%s2 + $0x18] sm:$0xff]
        %v359 = vld [vmem:[%s347] sm:$0xff]
        %v360 = vld [vmem:[%s347 + $0x8] sm:$0xff]
        %v361 = vld [vmem:[%s347 + $0x10] sm:$0xff]
        %v362 = vld [vmem:[%s347 + $0x18] sm:$0xff]
        %v363 = vld [vmem:[%s347 + $0x20] sm:$0xff]
        %v364 = vld [vmem:[%s347 + $0x28] sm:$0xff]
        %v365 = vld [vmem:[%s347 + $0x30] sm:$0xff]
        %v366 = vld [vmem:[%s347 + $0x38] sm:$0xff]
        %v367 = vld [vmem:[%s347 + $0x40] sm:$0xff]
        %v368 = vld [vmem:[%s347 + $0x48] sm:$0xff]
        %v369 = vld [vmem:[%s347 + $0x50] sm:$0xff]
        %v370 = vld [vmem:[%s347 + $0x58] sm:$0xff]
        %v371 = vld [vmem:[%s347 + $0x60] sm:$0xff]
        %v372 = vld [vmem:[%s347 + $0x68] sm:$0xff]
        %v373 = vld [vmem:[%s347 + $0x70] sm:$0xff]
        %v374 = vld [vmem:[%s347 + $0x78] sm:$0xff]
        %v375 = vld [vmem:[%s3] sm:$0xff]
        %v376 = vld [vmem:[%s3 + $0x8] sm:$0xff]
        %v377 = vld [vmem:[%s3 + $0x10] sm:$0xff]
        %v378 = vld [vmem:[%s3 + $0x18] sm:$0xff]
        %v379 = vld [vmem:[%s353] sm:$0xff]
        %v380 = vld [vmem:[%s353 + $0x8] sm:$0xff]
        %v381 = vld [vmem:[%s353 + $0x10] sm:$0xff]
        %v382 = vld [vmem:[%s353 + $0x18] sm:$0xff]
        %v383 = vld [vmem:[%s353 + $0x20] sm:$0xff]
        %v384 = vld [vmem:[%s353 + $0x28] sm:$0xff]
        %v385 = vld [vmem:[%s353 + $0x30] sm:$0xff]
        %v386 = vld [vmem:[%s353 + $0x38] sm:$0xff]
        %v387 = vld [vmem:[%s353 + $0x40] sm:$0xff]
        %v388 = vld [vmem:[%s353 + $0x48] sm:$0xff]
        %v389 = vld [vmem:[%s353 + $0x50] sm:$0xff]
        %v390 = vld [vmem:[%s353 + $0x58] sm:$0xff]
        %v391 = vld [vmem:[%s353 + $0x60] sm:$0xff]
        %v392 = vld [vmem:[%s353 + $0x68] sm:$0xff]
        %v393 = vld [vmem:[%s353 + $0x70] sm:$0xff]
        %v394 = vld [vmem:[%s353 + $0x78] sm:$0xff]
        %vm395 = vcmask 31744
        %v397 = vsel %vm395, %v375, 0
        %v400 = vsel %vm395, %v376, 0
        %v403 = vsel %vm395, %v377, 0
        %v406 = vsel %vm395, %v378, 0
        %v409 = vsel %vm395, %v379, 0
        %v412 = vsel %vm395, %v380, 0
        %v415 = vsel %vm395, %v381, 0
        %v418 = vsel %vm395, %v382, 0
        %v421 = vsel %vm395, %v383, 0
        %v424 = vsel %vm395, %v384, 0
        %v427 = vsel %vm395, %v385, 0
        %v430 = vsel %vm395, %v386, 0
        %v433 = vsel %vm395, %v387, 0
        %v436 = vsel %vm395, %v388, 0
        %v439 = vsel %vm395, %v389, 0
        %v442 = vsel %vm395, %v390, 0
        %v445 = vsel %vm395, %v391, 0
        %v448 = vsel %vm395, %v392, 0
        %v451 = vsel %vm395, %v393, 0
        %v454 = vsel %vm395, %v394, 0
        %456 = vmatprep.subr.mxu0 0.0
        %457 = vmatpush1.xpose.msra.mxu0 %v454
        %458 = vmatprep.subr.mxu0 0.0
        %459 = vmatpush1.xpose.msra.mxu0 %v451
        %460 = vmatprep.subr.mxu0 0.0
        %461 = vmatpush1.xpose.msra.mxu0 %v448
        %462 = vmatprep.subr.mxu0 0.0
        %463 = vmatpush1.xpose.msra.mxu0 %v445
        %464 = vmatprep.subr.mxu0 0.0
        %465 = vmatpush1.xpose.msra.mxu0 %v442
        %466 = vmatprep.subr.mxu0 0.0
        %467 = vmatpush1.xpose.msra.mxu0 %v439
        %468 = vmatprep.subr.mxu0 0.0
        %469 = vmatpush1.xpose.msra.mxu0 %v436
        %470 = vmatprep.subr.mxu0 0.0
        %471 = vmatpush1.xpose.msra.mxu0 %v433
        %472 = vmatprep.subr.mxu0 0.0
        %473 = vmatpush1.xpose.msra.mxu0 %v430
        %474 = vmatprep.subr.mxu0 0.0
        %475 = vmatpush1.xpose.msra.mxu0 %v427
        %476 = vmatprep.subr.mxu0 0.0
        %477 = vmatpush1.xpose.msra.mxu0 %v424
        %478 = vmatprep.subr.mxu0 0.0
        %479 = vmatpush1.xpose.msra.mxu0 %v421
        %480 = vmatprep.subr.mxu0 0.0
        %481 = vmatpush1.xpose.msra.mxu0 %v418
        %482 = vmatprep.subr.mxu0 0.0
        %483 = vmatpush1.xpose.msra.mxu0 %v415
        %484 = vmatprep.subr.mxu0 0.0
        %485 = vmatpush1.xpose.msra.mxu0 %v412
        %486 = vmatprep.subr.mxu0 0.0
        %487 = vmatpush1.xpose.msra.mxu0 %v409
        %488 = vmatprep.subr.mxu0 0.0
        %489 = vmatpush2.xpose.msra.mxu0 0.0
        %490 = vmatprep.subr.mxu0 0.0
        %491 = vmatpush2.xpose.msra.mxu0 0.0
        %492 = vmatprep.subr.mxu0 0.0
        %493 = vmatpush2.xpose.msra.mxu0 0.0
        %494 = vmatprep.subr.mxu0 0.0
        %495 = vmatpush2.xpose.msra.mxu0 0.0
        %496 = vmatprep.subr.mxu0 0.0
        %497 = vmatpush2.xpose.msra.mxu0 0.0
        %498 = vmatprep.subr.mxu0 0.0
        %499 = vmatpush2.xpose.msra.mxu0 0.0
        %500 = vmatprep.subr.mxu0 0.0
        %501 = vmatpush2.xpose.msra.mxu0 0.0
        %502 = vmatprep.subr.mxu0 0.0
        %503 = vmatpush2.xpose.msra.mxu0 0.0
        %504 = vmatprep.subr.mxu0 0.0
        %505 = vmatpush2.xpose.msra.mxu0 0.0
        %506 = vmatprep.subr.mxu0 0.0
        %507 = vmatpush2.xpose.msra.mxu0 0.0
        %508 = vmatprep.subr.mxu0 0.0
        %509 = vmatpush2.xpose.msra.mxu0 0.0
        %510 = vmatprep.subr.mxu0 0.0
        %511 = vmatpush2.xpose.msra.mxu0 0.0
        %512 = vmatprep.subr.mxu0 0.0
        %513 = vmatpush2.xpose.msra.mxu0 0.0
        %514 = vmatprep.subr.mxu0 0.0
        %515 = vmatpush2.xpose.msra.mxu0 0.0
        %516 = vmatprep.subr.mxu0 0.0
        %517 = vmatpush2.xpose.msra.mxu0 0.0
        %518 = vmatprep.subr.mxu0 0.0
        %519 = vmatpush2.xpose.msra.mxu0 0.0
        %520 = vmatprep.mubr.f32.mxu0 0.0
        %521 = vmatmul.mubr.f32.gmra.mxu0 %v397
        %v522 = vpop.f32.mrf.mxu0
        %v523 = vadd.f32 0.0, %v522
        %v524 = vpop.f32.mrf.mxu0
        %525 = vmatprep.mubr.f32.mxu0 0.0
        %526 = vmatmul.mubr.f32.gmra.mxu0 %v400
        %v527 = vpop.f32.mrf.mxu0
        %v528 = vadd.f32 0.0, %v527
        %v529 = vpop.f32.mrf.mxu0
        %530 = vmatprep.mubr.f32.mxu0 0.0
        %531 = vmatmul.mubr.f32.gmra.mxu0 %v403
        %v532 = vpop.f32.mrf.mxu0
        %v533 = vadd.f32 0.0, %v532
        %v534 = vpop.f32.mrf.mxu0
        %535 = vmatprep.mubr.f32.mxu0 0.0
        %536 = vmatmul.mubr.f32.gmra.mxu0 %v406
        %v537 = vpop.f32.mrf.mxu0
        %v538 = vadd.f32 0.0, %v537
        %v539 = vpop.f32.mrf.mxu0
        %540 = vdwg.mxu0
        %vm541 = vcmask 97280
        %v543 = vsel %vm541, %v355, 0
        %v546 = vsel %vm541, %v356, 0
        %v549 = vsel %vm541, %v357, 0
        %v552 = vsel %vm541, %v358, 0
        %v555 = vsel %vm541, %v359, 0
        %v558 = vsel %vm541, %v360, 0
        %v561 = vsel %vm541, %v361, 0
        %v564 = vsel %vm541, %v362, 0
        %v567 = vsel %vm541, %v363, 0
        %v570 = vsel %vm541, %v364, 0
        %v573 = vsel %vm541, %v365, 0
        %v576 = vsel %vm541, %v366, 0
        %v579 = vsel %vm541, %v367, 0
        %v582 = vsel %vm541, %v368, 0
        %v585 = vsel %vm541, %v369, 0
        %v588 = vsel %vm541, %v370, 0
        %v591 = vsel %vm541, %v371, 0
        %v594 = vsel %vm541, %v372, 0
        %v597 = vsel %vm541, %v373, 0
        %v600 = vsel %vm541, %v374, 0
        %602 = vmatprep.subr.mxu0 0.0
        %603 = vmatpush1.xpose.msra.mxu0 %v600
        %604 = vmatprep.subr.mxu0 0.0
        %605 = vmatpush1.xpose.msra.mxu0 %v597
        %606 = vmatprep.subr.mxu0 0.0
        %607 = vmatpush1.xpose.msra.mxu0 %v594
        %608 = vmatprep.subr.mxu0 0.0
        %609 = vmatpush1.xpose.msra.mxu0 %v591
        %610 = vmatprep.subr.mxu0 0.0
        %611 = vmatpush1.xpose.msra.mxu0 %v588
        %612 = vmatprep.subr.mxu0 0.0
        %613 = vmatpush1.xpose.msra.mxu0 %v585
        %614 = vmatprep.subr.mxu0 0.0
        %615 = vmatpush1.xpose.msra.mxu0 %v582
        %616 = vmatprep.subr.mxu0 0.0
        %617 = vmatpush1.xpose.msra.mxu0 %v579
        %618 = vmatprep.subr.mxu0 0.0
        %619 = vmatpush1.xpose.msra.mxu0 %v576
        %620 = vmatprep.subr.mxu0 0.0
        %621 = vmatpush1.xpose.msra.mxu0 %v573
        %622 = vmatprep.subr.mxu0 0.0
        %623 = vmatpush1.xpose.msra.mxu0 %v570
        %624 = vmatprep.subr.mxu0 0.0
        %625 = vmatpush1.xpose.msra.mxu0 %v567
        %626 = vmatprep.subr.mxu0 0.0
        %627 = vmatpush1.xpose.msra.mxu0 %v564
        %628 = vmatprep.subr.mxu0 0.0
        %629 = vmatpush1.xpose.msra.mxu0 %v561
        %630 = vmatprep.subr.mxu0 0.0
        %631 = vmatpush1.xpose.msra.mxu0 %v558
        %632 = vmatprep.subr.mxu0 0.0
        %633 = vmatpush1.xpose.msra.mxu0 %v555
        %634 = vmatprep.subr.mxu0 0.0
        %635 = vmatpush2.xpose.msra.mxu0 0.0
        %636 = vmatprep.subr.mxu0 0.0
        %637 = vmatpush2.xpose.msra.mxu0 0.0
        %638 = vmatprep.subr.mxu0 0.0
        %639 = vmatpush2.xpose.msra.mxu0 0.0
        %640 = vmatprep.subr.mxu0 0.0
        %641 = vmatpush2.xpose.msra.mxu0 0.0
        %642 = vmatprep.subr.mxu0 0.0
        %643 = vmatpush2.xpose.msra.mxu0 0.0
        %644 = vmatprep.subr.mxu0 0.0
        %645 = vmatpush2.xpose.msra.mxu0 0.0
        %646 = vmatprep.subr.mxu0 0.0
        %647 = vmatpush2.xpose.msra.mxu0 0.0
        %648 = vmatprep.subr.mxu0 0.0
        %649 = vmatpush2.xpose.msra.mxu0 0.0
        %650 = vmatprep.subr.mxu0 0.0
        %651 = vmatpush2.xpose.msra.mxu0 0.0
        %652 = vmatprep.subr.mxu0 0.0
        %653 = vmatpush2.xpose.msra.mxu0 0.0
        %654 = vmatprep.subr.mxu0 0.0
        %655 = vmatpush2.xpose.msra.mxu0 0.0
        %656 = vmatprep.subr.mxu0 0.0
        %657 = vmatpush2.xpose.msra.mxu0 0.0
        %658 = vmatprep.subr.mxu0 0.0
        %659 = vmatpush2.xpose.msra.mxu0 0.0
        %660 = vmatprep.subr.mxu0 0.0
        %661 = vmatpush2.xpose.msra.mxu0 0.0
        %662 = vmatprep.subr.mxu0 0.0
        %663 = vmatpush2.xpose.msra.mxu0 0.0
        %664 = vmatprep.subr.mxu0 0.0
        %665 = vmatpush2.xpose.msra.mxu0 0.0
        %666 = vmatprep.mubr.f32.mxu0 0.0
        %667 = vmatmul.mubr.f32.gmra.mxu0 %v543
        %v668 = vpop.f32.mrf.mxu0
        %v669 = vadd.f32 %v523, %v668
        %v670 = vpop.f32.mrf.mxu0
        %671 = vmatprep.mubr.f32.mxu0 0.0
        %672 = vmatmul.mubr.f32.gmra.mxu0 %v546
        %v673 = vpop.f32.mrf.mxu0
        %v674 = vadd.f32 %v528, %v673
        %v675 = vpop.f32.mrf.mxu0
        %676 = vmatprep.mubr.f32.mxu0 0.0
        %677 = vmatmul.mubr.f32.gmra.mxu0 %v549
        %v678 = vpop.f32.mrf.mxu0
        %v679 = vadd.f32 %v533, %v678
        %v680 = vpop.f32.mrf.mxu0
        %681 = vmatprep.mubr.f32.mxu0 0.0
        %682 = vmatmul.mubr.f32.gmra.mxu0 %v552
        %v683 = vpop.f32.mrf.mxu0
        %v684 = vadd.f32 %v538, %v683
        %v685 = vpop.f32.mrf.mxu0
        %686 = vdwg.mxu0
        %v687 = vld [vmem:[%s4] sm:$0xff]
        %v688 = vld [vmem:[%s4 + $0x8] sm:$0xff]
        %v689 = vld [vmem:[%s4 + $0x10] sm:$0xff]
        %v690 = vld [vmem:[%s4 + $0x18] sm:$0xff]
        %692 = vset.pattern.permute.xlu0 0
        %693 = vperm.xlu0 %692, %v687
        %v694 = vpop.permute.xlu0 %693
        %697 = vset.pattern.permute.xlu0 0
        %698 = vperm.xlu0 %697, %v688
        %v699 = vpop.permute.xlu0 %698
        %702 = vset.pattern.permute.xlu0 0
        %703 = vperm.xlu0 %702, %v689
        %v704 = vpop.permute.xlu0 %703
        %707 = vset.pattern.permute.xlu0 0
        %708 = vperm.xlu0 %707, %v690
        %v709 = vpop.permute.xlu0 %708
        %v711 = vadd.f32 %v669, %v694
        %v712 = vadd.f32 %v674, %v699
        %v713 = vadd.f32 %v679, %v704
        %v714 = vadd.f32 %v684, %v709
        %v715 = vmax.f32 %v711, 0.0
        %v716 = vmax.f32 %v712, 0.0
        %v717 = vmax.f32 %v713, 0.0
        %v718 = vmax.f32 %v714, 0.0
        %v719 = vld [vmem:[%s5] sm:$0xff]
        %v720 = vld [vmem:[%s5 + $0x8] sm:$0xff]
        %v721 = vld [vmem:[%s5 + $0x10] sm:$0xff]
        %v722 = vld [vmem:[%s5 + $0x18] sm:$0xff]
        %v723 = vld [vmem:[%s6] sm:$0xff]
        %v724 = vld [vmem:[%s6 + $0x8] sm:$0xff]
        %v725 = vld [vmem:[%s6 + $0x10] sm:$0xff]
        %v726 = vld [vmem:[%s6 + $0x18] sm:$0xff]
        %728 = vset.pattern.permute.xlu0 0
        %729 = vperm.xlu0 %728, %v723
        %v730 = vpop.permute.xlu0 %729
        %733 = vset.pattern.permute.xlu0 0
        %734 = vperm.xlu0 %733, %v724
        %v735 = vpop.permute.xlu0 %734
        %738 = vset.pattern.permute.xlu0 0
        %739 = vperm.xlu0 %738, %v725
        %v740 = vpop.permute.xlu0 %739
        %743 = vset.pattern.permute.xlu0 0
        %744 = vperm.xlu0 %743, %v726
        %v745 = vpop.permute.xlu0 %744
        %vm747 = vcmask 261120
        %v749 = vsel %vm747, %v719, 0
        %v752 = vsel %vm747, %v720, 0
        %v755 = vsel %vm747, %v721, 0
        %v758 = vsel %vm747, %v722, 0
        %760 = vmatprep.subr.mxu0 0.0
        %761 = vmatpush1.msra.mxu0 0.0
        %762 = vmatprep.subr.mxu0 0.0
        %763 = vmatpush1.msra.mxu0 0.0
        %764 = vmatprep.subr.mxu0 0.0
        %765 = vmatpush1.msra.mxu0 0.0
        %766 = vmatprep.subr.mxu0 0.0
        %767 = vmatpush1.msra.mxu0 0.0
        %768 = vmatprep.subr.mxu0 0.0
        %769 = vmatpush1.msra.mxu0 0.0
        %770 = vmatprep.subr.mxu0 0.0
        %771 = vmatpush1.msra.mxu0 0.0
        %772 = vmatprep.subr.mxu0 0.0
        %773 = vmatpush1.msra.mxu0 0.0
        %774 = vmatprep.subr.mxu0 0.0
        %775 = vmatpush1.msra.mxu0 0.0
        %776 = vmatprep.subr.mxu0 0.0
        %777 = vmatpush1.msra.mxu0 0.0
        %778 = vmatprep.subr.mxu0 0.0
        %779 = vmatpush1.msra.mxu0 0.0
        %780 = vmatprep.subr.mxu0 0.0
        %781 = vmatpush1.msra.mxu0 0.0
        %782 = vmatprep.subr.mxu0 0.0
        %783 = vmatpush1.msra.mxu0 0.0
        %784 = vmatprep.subr.mxu0 0.0
        %785 = vmatpush1.msra.mxu0 %v718
        %786 = vmatprep.subr.mxu0 0.0
        %787 = vmatpush1.msra.mxu0 %v717
        %788 = vmatprep.subr.mxu0 0.0
        %789 = vmatpush1.msra.mxu0 %v716
        %790 = vmatprep.subr.mxu0 0.0
        %791 = vmatpush1.msra.mxu0 %v715
        %792 = vmatprep.subr.mxu0 0.0
        %793 = vmatpush2.msra.mxu0 0.0
        %794 = vmatprep.subr.mxu0 0.0
        %795 = vmatpush2.msra.mxu0 0.0
        %796 = vmatprep.subr.mxu0 0.0
        %797 = vmatpush2.msra.mxu0 0.0
        %798 = vmatprep.subr.mxu0 0.0
        %799 = vmatpush2.msra.mxu0 0.0
        %800 = vmatprep.subr.mxu0 0.0
        %801 = vmatpush2.msra.mxu0 0.0
        %802 = vmatprep.subr.mxu0 0.0
        %803 = vmatpush2.msra.mxu0 0.0
        %804 = vmatprep.subr.mxu0 0.0
        %805 = vmatpush2.msra.mxu0 0.0
        %806 = vmatprep.subr.mxu0 0.0
        %807 = vmatpush2.msra.mxu0 0.0
        %808 = vmatprep.subr.mxu0 0.0
        %809 = vmatpush2.msra.mxu0 0.0
        %810 = vmatprep.subr.mxu0 0.0
        %811 = vmatpush2.msra.mxu0 0.0
        %812 = vmatprep.subr.mxu0 0.0
        %813 = vmatpush2.msra.mxu0 0.0
        %814 = vmatprep.subr.mxu0 0.0
        %815 = vmatpush2.msra.mxu0 0.0
        %816 = vmatprep.subr.mxu0 0.0
        %817 = vmatpush2.msra.mxu0 0.0
        %818 = vmatprep.subr.mxu0 0.0
        %819 = vmatpush2.msra.mxu0 0.0
        %820 = vmatprep.subr.mxu0 0.0
        %821 = vmatpush2.msra.mxu0 0.0
        %822 = vmatprep.subr.mxu0 0.0
        %823 = vmatpush2.msra.mxu0 0.0
        %824 = vmatprep.mubr.f32.mxu0 0.0
        %825 = vmatmul.mubr.f32.gmra.mxu0 %v749
        %v826 = vpop.f32.mrf.mxu0
        %v827 = vadd.f32 %v730, %v826
        %v828 = vpop.f32.mrf.mxu0
        %829 = vmatprep.mubr.f32.mxu0 0.0
        %830 = vmatmul.mubr.f32.gmra.mxu0 %v752
        %v831 = vpop.f32.mrf.mxu0
        %v832 = vadd.f32 %v735, %v831
        %v833 = vpop.f32.mrf.mxu0
        %834 = vmatprep.mubr.f32.mxu0 0.0
        %835 = vmatmul.mubr.f32.gmra.mxu0 %v755
        %v836 = vpop.f32.mrf.mxu0
        %v837 = vadd.f32 %v740, %v836
        %v838 = vpop.f32.mrf.mxu0
        %839 = vmatprep.mubr.f32.mxu0 0.0
        %840 = vmatmul.mubr.f32.gmra.mxu0 %v758
        %v841 = vpop.f32.mrf.mxu0
        %v842 = vadd.f32 %v745, %v841
        %v843 = vpop.f32.mrf.mxu0
        %844 = vdwg.mxu0
        %v845 = vmax.f32 %v827, 0.0
        %v846 = vmax.f32 %v832, 0.0
        %v847 = vmax.f32 %v837, 0.0
        %v848 = vmax.f32 %v842, 0.0
        %v849 = vld [vmem:[%s7] sm:$0x1]
        %s850 = sld [smem:[#allocation2]]
        %v851 = vstv %s850
        %v853 = vsel %vm747, %v849, 0
        %855 = vmatprep.subr.mxu0 0.0
        %856 = vmatpush1.msra.mxu0 0.0
        %857 = vmatprep.subr.mxu0 0.0
        %858 = vmatpush1.msra.mxu0 0.0
        %859 = vmatprep.subr.mxu0 0.0
        %860 = vmatpush1.msra.mxu0 0.0
        %861 = vmatprep.subr.mxu0 0.0
        %862 = vmatpush1.msra.mxu0 0.0
        %863 = vmatprep.subr.mxu0 0.0
        %864 = vmatpush1.msra.mxu0 0.0
        %865 = vmatprep.subr.mxu0 0.0
        %866 = vmatpush1.msra.mxu0 0.0
        %867 = vmatprep.subr.mxu0 0.0
        %868 = vmatpush1.msra.mxu0 0.0
        %869 = vmatprep.subr.mxu0 0.0
        %870 = vmatpush1.msra.mxu0 0.0
        %871 = vmatprep.subr.mxu0 0.0
        %872 = vmatpush1.msra.mxu0 0.0
        %873 = vmatprep.subr.mxu0 0.0
        %874 = vmatpush1.msra.mxu0 0.0
        %875 = vmatprep.subr.mxu0 0.0
        %876 = vmatpush1.msra.mxu0 0.0
        %877 = vmatprep.subr.mxu0 0.0
        %878 = vmatpush1.msra.mxu0 0.0
        %879 = vmatprep.subr.mxu0 0.0
        %880 = vmatpush1.msra.mxu0 %v848
        %881 = vmatprep.subr.mxu0 0.0
        %882 = vmatpush1.msra.mxu0 %v847
        %883 = vmatprep.subr.mxu0 0.0
        %884 = vmatpush1.msra.mxu0 %v846
        %885 = vmatprep.subr.mxu0 0.0
        %886 = vmatpush1.msra.mxu0 %v845
        %887 = vmatprep.subr.mxu0 0.0
        %888 = vmatpush2.msra.mxu0 0.0
        %889 = vmatprep.subr.mxu0 0.0
        %890 = vmatpush2.msra.mxu0 0.0
        %891 = vmatprep.subr.mxu0 0.0
        %892 = vmatpush2.msra.mxu0 0.0
        %893 = vmatprep.subr.mxu0 0.0
        %894 = vmatpush2.msra.mxu0 0.0
        %895 = vmatprep.subr.mxu0 0.0
        %896 = vmatpush2.msra.mxu0 0.0
        %897 = vmatprep.subr.mxu0 0.0
        %898 = vmatpush2.msra.mxu0 0.0
        %899 = vmatprep.subr.mxu0 0.0
        %900 = vmatpush2.msra.mxu0 0.0
        %901 = vmatprep.subr.mxu0 0.0
        %902 = vmatpush2.msra.mxu0 0.0
        %903 = vmatprep.subr.mxu0 0.0
        %904 = vmatpush2.msra.mxu0 0.0
        %905 = vmatprep.subr.mxu0 0.0
        %906 = vmatpush2.msra.mxu0 0.0
        %907 = vmatprep.subr.mxu0 0.0
        %908 = vmatpush2.msra.mxu0 0.0
        %909 = vmatprep.subr.mxu0 0.0
        %910 = vmatpush2.msra.mxu0 0.0
        %911 = vmatprep.subr.mxu0 0.0
        %912 = vmatpush2.msra.mxu0 0.0
        %913 = vmatprep.subr.mxu0 0.0
        %914 = vmatpush2.msra.mxu0 0.0
        %915 = vmatprep.subr.mxu0 0.0
        %916 = vmatpush2.msra.mxu0 0.0
        %917 = vmatprep.subr.mxu0 0.0
        %918 = vmatpush2.msra.mxu0 0.0
        %919 = vmatprep.mubr.f32.mxu0 0.0
        %920 = vmatmul.mubr.f32.gmra.mxu0 %v853
        %v921 = vpop.f32.mrf.mxu0
        %v922 = vadd.f32 %v851, %v921
        %v923 = vpop.f32.mrf.mxu0
        %924 = vdwg.mxu0
        %925 = vst [vmem:[%s342] sm:$0x1] %v922
        %s926 = sand.u32 %s231, 1
        %s927 = scalar_lea.sflag [#allocation4], %s926
        %s928 = sand.u32 %s231, 1
        %s929 = scalar_lea.vmem [#allocation3], %s928
        // Predicated region
        $region57: #{tpu_custom_call.1} parent=55 // pred_check
          %p930 = pneg %p241
        $region58: #{tpu_custom_call.1} parent=55 // pred_check_branch
          %932 = sbr.rel (%p930) target = $region60
        $region59: #{tpu_custom_call.1} parent=55 // pred_region
          %s934 = ssub.s32 16, 16
          %935 = vsyncadd %s927, %s934
          %s936 = smul.addr %s24, 16
          %s937 = scalar_lea.hbm %s9, %s936
          %s939 = sshll.u32 %s929, 4
          %s940 = int_to_ptr.vmem [resolvable:$true] %s939
          %942 = dma.vmem_to_hbm [thread:$0]  %s940, 16, %s937, %s927
        $region60: #{tpu_custom_call.1} parent=55 // pred_fallthru
          _
      $region56: #{tpu_custom_call.1} parent=5 // pred_fallthru
        _
      %p943 = scmp.le.s32.totalorder 2, %s19
      // Predicated region
      $region61: #{tpu_custom_call.1} parent=5 // pred_check
        %p944 = pneg %p943
      $region62: #{tpu_custom_call.1} parent=5 // pred_check_branch
        %946 = sbr.rel (%p944) target = $region64
      $region63: #{tpu_custom_call.1} parent=5 // pred_region
        %s947 = ssub.s32 %s19, 2
        // Predicated region
        $region65: #{tpu_custom_call.1} parent=63 // pred_check
          %p948 = pneg %p247
        $region66: #{tpu_custom_call.1} parent=63 // pred_check_branch
          %950 = sbr.rel (%p948) target = $region68
        $region67: #{tpu_custom_call.1} parent=63 // pred_region
          %s951 = sand.u32 %s232, 1
          %s952 = scalar_lea.sflag [#allocation4], %s951
          %s953 = sand.u32 %s232, 1
          %s954 = scalar_lea.vmem [#allocation3], %s953
          %955 = dma.done %s952, 16
        $region68: #{tpu_custom_call.1} parent=63 // pred_fallthru
          _
      $region64: #{tpu_custom_call.1} parent=5 // pred_fallthru
        _
    $region6: #{tpu_custom_call.1} parent=1 // loop_footer
      %s23 = sadd.s32 1, %s19
    $region7: #{tpu_custom_call.1} parent=1 // loop_footer_branch
      %18 = sbr.rel target = $region3
    $region8: #{tpu_custom_call.1} parent=1 // loop_exit
      _
    %956 = vsyncpa [#allocation4], 1
    %s957 = scalar_lea.sflag [#allocation4], 1
    %958 = vsyncpa %s957, 1

</llo_original>
